<compile_context>
chip_gen: v5e
topology: v5e:2x2
jax: 0.10.0
libtpu: 0.0.40
codegen_flags: <defaults>
</compile_context>

<pallas_src>
import functools

import jax
import jax.numpy as jnp
from jax.experimental import pallas as pl
from jax.experimental.pallas import tpu as pltpu

# Fixed Sobel weights (same values as the nn.Parameter buffers in __init__).
_SOBEL_X = ((-1.0, 0.0, 1.0),
            (-2.0, 0.0, 2.0),
            (-1.0, 0.0, 1.0))
_SOBEL_Y = ((-1.0, -2.0, -1.0),
            ( 0.0,  0.0,  0.0),
            ( 1.0,  2.0,  1.0))


def _gw_loss_kernel(x1_ref, x2_ref, out_ref, dpad_ref, *, w, P, H, W):
    """One grid step: P planes -> per-lane partial loss sums (length W)."""
    # Difference once (conv is linear): |Ix1-Ix2| == |conv_x(x1-x2)| etc.
    d = x1_ref[...].astype(jnp.float32) - x2_ref[...].astype(jnp.float32)

    # Build zero-padded copy of d in VMEM scratch (border zeros emulate the
    # padding=1 of F.conv2d without materializing a padded HBM copy).
    # Borders are re-zeroed every step so "parallel" grid semantics are safe.
    dpad_ref[:, 0:1, :] = jnp.zeros((P, 1, W + 2), jnp.float32)
    dpad_ref[:, H + 1:H + 2, :] = jnp.zeros((P, 1, W + 2), jnp.float32)
    dpad_ref[:, :, 0:1] = jnp.zeros((P, H + 2, 1), jnp.float32)
    dpad_ref[:, :, W + 1:W + 2] = jnp.zeros((P, H + 2, 1), jnp.float32)
    dpad_ref[:, 1:H + 1, 1:W + 1] = d

    # Separable Sobel (cross-correlation, matches F.conv2d):
    #   Sx = [1,2,1]^T (H)  x  [-1,0,1] (W)
    #   Sy = [-1,0,1]^T (H) x  [1,2,1]  (W)
    top = dpad_ref[:, 0:H, :]          # (P, H, W+2)
    mid = dpad_ref[:, 1:H + 1, :]
    bot = dpad_ref[:, 2:H + 2, :]

    s_h = top + 2.0 * mid + bot        # smooth along H
    d_h = bot - top                    # diff along H

    ix = s_h[:, :, 2:W + 2] - s_h[:, :, 0:W]                        # diff W
    iy = d_h[:, :, 0:W] + 2.0 * d_h[:, :, 1:W + 1] + d_h[:, :, 2:W + 2]

    loss = (1.0 + w * jnp.abs(ix)) * (1.0 + w * jnp.abs(iy)) * jnp.abs(d)

    # Reduce over planes + rows only (keep the lane axis); final cross-lane
    # reduce is done once in the wrapper.
    out_ref[0, 0, :] = jnp.sum(loss, axis=(0, 1))


def gw_loss(x1, x2, w=4, reduction="mean"):
    """Pallas implementation of GWLoss.forward (x1, x2 are NCHW)."""
    b, c, hh, ww = x1.shape
    n = b * c
    x1f = x1.reshape(n, hh, ww)
    x2f = x2.reshape(n, hh, ww)

    # Planes per block: target ~2 MiB per input block (fits comfortably under
    # v7x's scoped VMEM with double buffering), and must divide n evenly.
    plane_bytes = hh * ww * max(x1.dtype.itemsize, 4)
    target_p = max(1, min(n, (2 * 1024 * 1024) // max(plane_bytes, 1)))
    p = 1
    for cand in range(target_p, 0, -1):
        if n % cand == 0:
            p = cand
            break
    num_blocks = n // p

    kern = functools.partial(_gw_loss_kernel, w=float(w), P=p, H=hh, W=ww)

    partials = pl.pallas_call(
        kern,
        out_shape=jax.ShapeDtypeStruct((num_blocks, 1, ww), jnp.float32),
        grid=(num_blocks,),
        in_specs=[
            pl.BlockSpec((p, hh, ww), lambda i: (i, 0, 0)),
            pl.BlockSpec((p, hh, ww), lambda i: (i, 0, 0)),
        ],
        out_specs=pl.BlockSpec((1, 1, ww), lambda i: (i, 0, 0)),
        scratch_shapes=[pltpu.VMEM((p, hh + 2, ww + 2), jnp.float32)],
        compiler_params=pltpu.CompilerParams(
            dimension_semantics=("parallel",)),
    )(x1f, x2f)

    total = jnp.sum(partials)
    if reduction == "mean":
        return total / (b * c * hh * ww)
    return total


def gw_loss_ref(x1, x2, w=4, reduction="mean"):
    """Pure-JAX reference (same math as the PyTorch module)."""
    b, c, hh, ww = x1.shape

    def conv(x, k):
        xp = jnp.pad(x, ((0, 0), (0, 0), (1, 1), (1, 1)))
        acc = jnp.zeros_like(x)
        for u in range(3):
            for v in range(3):
                acc = acc + k[u][v] * xp[:, :, u:u + hh, v:v + ww]
        return acc

    ix1 = conv(x1, _SOBEL_X)
    ix2 = conv(x2, _SOBEL_X)
    iy1 = conv(x1, _SOBEL_Y)
    iy2 = conv(x2, _SOBEL_Y)
    dx = jnp.abs(ix1 - ix2)
    dy = jnp.abs(iy1 - iy2)
    loss = (1.0 + w * dx) * (1.0 + w * dy) * jnp.abs(x1 - x2)
    return jnp.mean(loss) if reduction == "mean" else jnp.sum(loss)


if __name__ == "__main__":
    key = jax.random.PRNGKey(0)
    k1, k2 = jax.random.split(key)
    x1 = jax.random.normal(k1, (2, 4, 16, 16), dtype=jnp.float32)
    x2 = jax.random.normal(k2, (2, 4, 16, 16), dtype=jnp.float32)

    out = gw_loss(x1, x2, w=4, reduction="mean")
    out = jax.block_until_ready(out)

    ref = gw_loss_ref(x1, x2, w=4, reduction="mean")
    assert jnp.allclose(out, ref, rtol=1e-5, atol=1e-5), (out, ref)

    out_sum = jax.block_until_ready(gw_loss(x1, x2, w=4, reduction="sum"))
    ref_sum = gw_loss_ref(x1, x2, w=4, reduction="sum")
    assert jnp.allclose(out_sum, ref_sum, rtol=1e-5, atol=1e-4), (out_sum, ref_sum)

    print("KERNEL_OK")
</pallas_src>

<mosaic_0001>
module attributes {stable_mosaic.version = 11 : i64} {
  func.func @_gw_loss_kernel(%arg0: i32, %arg1: memref<8x16x16xf32, #tpu.memory_space<vmem>>, %arg2: memref<8x16x16xf32, #tpu.memory_space<vmem>>, %arg3: memref<1x1x16xf32, #tpu.memory_space<vmem>>, %arg4: memref<8x18x18xf32, #tpu.memory_space<vmem>>) attributes {dimension_semantics = [#tpu.dimension_semantics<parallel>], iteration_bounds = array<i64: 1>, scalar_prefetch = 0 : i64, scratch_operands = 1 : i64, tpu.core_type = #tpu.core_type<tc>, window_params = [{transform_indices = @transform_0, window_bounds = array<i64: 8, 16, 16>}, {transform_indices = @transform_1, window_bounds = array<i64: 8, 16, 16>}, {transform_indices = @transform_2, window_bounds = array<i64: 1, 1, 16>}]} {
    %c0 = arith.constant 0 : index
    %c0_0 = arith.constant 0 : index
    %c0_1 = arith.constant 0 : index
    %0 = vector.load %arg1[%c0, %c0_0, %c0_1] : memref<8x16x16xf32, #tpu.memory_space<vmem>>, vector<8x16x16xf32>
    %c0_2 = arith.constant 0 : index
    %c0_3 = arith.constant 0 : index
    %c0_4 = arith.constant 0 : index
    %1 = vector.load %arg2[%c0_2, %c0_3, %c0_4] : memref<8x16x16xf32, #tpu.memory_space<vmem>>, vector<8x16x16xf32>
    %2 = arith.subf %0, %1 : vector<8x16x16xf32>
    %cst = arith.constant 0.000000e+00 : f32
    %3 = vector.broadcast %cst : f32 to vector<8x1x18xf32>
    %c0_5 = arith.constant 0 : index
    %c0_6 = arith.constant 0 : index
    %c0_7 = arith.constant 0 : index
    %4 = vector.load %arg4[%c0_5, %c0_6, %c0_7] : memref<8x18x18xf32, #tpu.memory_space<vmem>>, vector<8x1x18xf32>
    tpu.vector_store %arg4[%c0_5, %c0_6, %c0_7], %3 {strides = array<i32>} : memref<8x18x18xf32, #tpu.memory_space<vmem>>, vector<8x1x18xf32>,
    %cst_8 = arith.constant 0.000000e+00 : f32
    %5 = vector.broadcast %cst_8 : f32 to vector<8x1x18xf32>
    %c0_9 = arith.constant 0 : index
    %c17 = arith.constant 17 : index
    %c0_10 = arith.constant 0 : index
    %6 = vector.load %arg4[%c0_9, %c17, %c0_10] : memref<8x18x18xf32, #tpu.memory_space<vmem>>, vector<8x1x18xf32>
    tpu.vector_store %arg4[%c0_9, %c17, %c0_10], %5 {strides = array<i32>} : memref<8x18x18xf32, #tpu.memory_space<vmem>>, vector<8x1x18xf32>,
    %cst_11 = arith.constant 0.000000e+00 : f32
    %7 = vector.broadcast %cst_11 : f32 to vector<8x18x1xf32>
    %c0_12 = arith.constant 0 : index
    %c0_13 = arith.constant 0 : index
    %c0_14 = arith.constant 0 : index
    %8 = vector.load %arg4[%c0_12, %c0_13, %c0_14] : memref<8x18x18xf32, #tpu.memory_space<vmem>>, vector<8x18x1xf32>
    tpu.vector_store %arg4[%c0_12, %c0_13, %c0_14], %7 {strides = array<i32>} : memref<8x18x18xf32, #tpu.memory_space<vmem>>, vector<8x18x1xf32>,
    %cst_15 = arith.constant 0.000000e+00 : f32
    %9 = vector.broadcast %cst_15 : f32 to vector<8x18x1xf32>
    %c0_16 = arith.constant 0 : index
    %c0_17 = arith.constant 0 : index
    %c17_18 = arith.constant 17 : index
    %10 = vector.load %arg4[%c0_16, %c0_17, %c17_18] : memref<8x18x18xf32, #tpu.memory_space<vmem>>, vector<8x18x1xf32>
    tpu.vector_store %arg4[%c0_16, %c0_17, %c17_18], %9 {strides = array<i32>} : memref<8x18x18xf32, #tpu.memory_space<vmem>>, vector<8x18x1xf32>,
    %c0_19 = arith.constant 0 : index
    %c1 = arith.constant 1 : index
    %c1_20 = arith.constant 1 : index
    %11 = vector.load %arg4[%c0_19, %c1, %c1_20] : memref<8x18x18xf32, #tpu.memory_space<vmem>>, vector<8x16x16xf32>
    tpu.vector_store %arg4[%c0_19, %c1, %c1_20], %2 {strides = array<i32>} : memref<8x18x18xf32, #tpu.memory_space<vmem>>, vector<8x16x16xf32>,
    %c0_21 = arith.constant 0 : index
    %c0_22 = arith.constant 0 : index
    %c0_23 = arith.constant 0 : index
    %12 = vector.load %arg4[%c0_21, %c0_22, %c0_23] : memref<8x18x18xf32, #tpu.memory_space<vmem>>, vector<8x16x18xf32>
    %c0_24 = arith.constant 0 : index
    %c1_25 = arith.constant 1 : index
    %c0_26 = arith.constant 0 : index
    %13 = vector.load %arg4[%c0_24, %c1_25, %c0_26] : memref<8x18x18xf32, #tpu.memory_space<vmem>>, vector<8x16x18xf32>
    %c0_27 = arith.constant 0 : index
    %c2 = arith.constant 2 : index
    %c0_28 = arith.constant 0 : index
    %14 = vector.load %arg4[%c0_27, %c2, %c0_28] : memref<8x18x18xf32, #tpu.memory_space<vmem>>, vector<8x16x18xf32>
    %cst_29 = arith.constant 2.000000e+00 : f32
    %15 = vector.broadcast %cst_29 : f32 to vector<8x16x18xf32>
    %16 = arith.mulf %15, %13 : vector<8x16x18xf32>
    %17 = arith.addf %12, %16 : vector<8x16x18xf32>
    %18 = arith.addf %17, %14 : vector<8x16x18xf32>
    %19 = arith.subf %14, %12 : vector<8x16x18xf32>
    %20 = vector.extract_strided_slice %18 {offsets = [0, 0, 2], sizes = [8, 16, 16], strides = [1, 1, 1]} : vector<8x16x18xf32> to vector<8x16x16xf32>
    %21 = vector.extract_strided_slice %18 {offsets = [0, 0, 0], sizes = [8, 16, 16], strides = [1, 1, 1]} : vector<8x16x18xf32> to vector<8x16x16xf32>
    %22 = arith.subf %20, %21 : vector<8x16x16xf32>
    %23 = vector.extract_strided_slice %19 {offsets = [0, 0, 0], sizes = [8, 16, 16], strides = [1, 1, 1]} : vector<8x16x18xf32> to vector<8x16x16xf32>
    %24 = vector.extract_strided_slice %19 {offsets = [0, 0, 1], sizes = [8, 16, 16], strides = [1, 1, 1]} : vector<8x16x18xf32> to vector<8x16x16xf32>
    %cst_30 = arith.constant 2.000000e+00 : f32
    %25 = vector.broadcast %cst_30 : f32 to vector<8x16x16xf32>
    %26 = arith.mulf %25, %24 : vector<8x16x16xf32>
    %27 = arith.addf %23, %26 : vector<8x16x16xf32>
    %28 = vector.extract_strided_slice %19 {offsets = [0, 0, 2], sizes = [8, 16, 16], strides = [1, 1, 1]} : vector<8x16x18xf32> to vector<8x16x16xf32>
    %29 = arith.addf %27, %28 : vector<8x16x16xf32>
    %30 = math.absf %22 : vector<8x16x16xf32>
    %cst_31 = arith.constant 4.000000e+00 : f32
    %31 = vector.broadcast %cst_31 : f32 to vector<8x16x16xf32>
    %32 = arith.mulf %31, %30 : vector<8x16x16xf32>
    %cst_32 = arith.constant 1.000000e+00 : f32
    %33 = vector.broadcast %cst_32 : f32 to vector<8x16x16xf32>
    %34 = arith.addf %33, %32 : vector<8x16x16xf32>
    %35 = math.absf %29 : vector<8x16x16xf32>
    %cst_33 = arith.constant 4.000000e+00 : f32
    %36 = vector.broadcast %cst_33 : f32 to vector<8x16x16xf32>
    %37 = arith.mulf %36, %35 : vector<8x16x16xf32>
    %cst_34 = arith.constant 1.000000e+00 : f32
    %38 = vector.broadcast %cst_34 : f32 to vector<8x16x16xf32>
    %39 = arith.addf %38, %37 : vector<8x16x16xf32>
    %40 = arith.mulf %34, %39 : vector<8x16x16xf32>
    %41 = math.absf %2 : vector<8x16x16xf32>
    %42 = arith.mulf %40, %41 : vector<8x16x16xf32>
    %cst_35 = arith.constant dense<0.000000e+00> : vector<16xf32>
    %43 = vector.multi_reduction <add>, %42, %cst_35 [0, 1] : vector<8x16x16xf32> to vector<16xf32>
    %c0_36 = arith.constant 0 : index
    %c0_37 = arith.constant 0 : index
    %c0_38 = arith.constant 0 : index
    %44 = vector.load %arg3[%c0_36, %c0_37, %c0_38] : memref<1x1x16xf32, #tpu.memory_space<vmem>>, vector<1x1x16xf32>
    %45 = vector.shape_cast %44 : vector<1x1x16xf32> to vector<16xf32>
    %46 = vector.shape_cast %43 : vector<16xf32> to vector<1x1x16xf32>
    tpu.vector_store %arg3[%c0_36, %c0_37, %c0_38], %46 {strides = array<i32>} : memref<1x1x16xf32, #tpu.memory_space<vmem>>, vector<1x1x16xf32>,
    return
  }
  func.func @transform_0(%arg0: i32) -> (i32, i32, i32) {
    %c0_i32 = arith.constant 0 : i32
    %c0_i32_0 = arith.constant 0 : i32
    %c0_i32_1 = arith.constant 0 : i32
    return %arg0, %c0_i32, %c0_i32_0 : i32, i32, i32
  }
  func.func @transform_1(%arg0: i32) -> (i32, i32, i32) {
    %c0_i32 = arith.constant 0 : i32
    %c0_i32_0 = arith.constant 0 : i32
    %c0_i32_1 = arith.constant 0 : i32
    return %arg0, %c0_i32, %c0_i32_0 : i32, i32, i32
  }
  func.func @transform_2(%arg0: i32) -> (i32, i32, i32) {
    %c0_i32 = arith.constant 0 : i32
    %c0_i32_0 = arith.constant 0 : i32
    %c0_i32_1 = arith.constant 0 : i32
    return %arg0, %c0_i32, %c0_i32_0 : i32, i32, i32
  }
}

</mosaic_0001>

<llo_original>
// kernel: tpu_custom_call.1
$region0: #{tpu_custom_call.1}
  #allocation0 [shape = 'u32[]', space=smem, size = 0x4, offset = 0x4, fixed_abs, tag = 'smem constant byte address 0x4 - core index']
  #allocation1 [shape = 'u32[72,128]{1,0:T(1,128)}', space=vmem, size = 0x9000, scoped, tag = 'internal scratch']
  #allocation2 [shape = 'f32[8,18,18]{2,1,0:T(8,128)}', space=vmem, size = 0x18000, scoped, tag = 'scratch operand']
  %s0 = inlined_call_operand.hbm [shape: f32[8,16,16], index: 0, kind: input, shape index: {}]
  %s1 = inlined_call_operand.hbm [shape: f32[8,16,16], index: 1, kind: input, shape index: {}]
  %s2 = inlined_call_operand.hbm [shape: f32[1,1,16], index: 2, kind: output, shape index: {}]
  %s3 = sld [smem:[#allocation0]]
  $region26: #{tpu_custom_call.1} parent=0
    _
  %s5 = ssub.s32 1, %s3
  %s6 = scalar_select 0, %s5, %s3
  $region1: #{tpu_custom_call.1} parent=0
    #allocation3 [shape = 'u8[65536]{0}', space=vmem, size = 0x10000, scoped, tag = 'input window, operand 0, single buffered']
    #allocation4 [shape = 's32[1]{0}', space=sflag, size = 0x4, scoped, tag = 'scoped memory for tpu_custom_call.1']
    #allocation5 [shape = 's32[1]{0}', space=sflag, size = 0x4, scoped, tag = 'scoped memory for tpu_custom_call.1']
    #allocation6 [shape = 'u8[65536]{0}', space=vmem, size = 0x10000, scoped, tag = 'input window, operand 1, single buffered']
    #allocation7 [shape = 's32[1]{0}', space=sflag, size = 0x4, scoped, tag = 'scoped memory for tpu_custom_call.1']
    #allocation8 [shape = 'u8[512]{0}', space=vmem, size = 0x400, scoped, tag = 'output window, operand 0, single buffered']
    %7 = vsyncpa [#allocation4], 0
    %8 = vsyncpa [#allocation7], 0
    %9 = vsyncpa [#allocation5], 0
    // Predicated region
    $region2: #{tpu_custom_call.1} parent=1 // pred_check
      _
    $region3: #{tpu_custom_call.1} parent=1 // pred_check_branch
      %11 = sbr.rel (0) target = $region5
    $region4: #{tpu_custom_call.1} parent=1 // pred_region
      %13 = vsyncadd [#allocation4], 0
      %s14 = sshll.u32 %s0, 4
      %s15 = int_to_ptr.hbm [resolvable:$true] %s14
      %s16 = sshll.u32 [#allocation3], 4
      %s17 = int_to_ptr.vmem [resolvable:$true] %s16
      %22 = dma.hbm_to_vmem [thread:$0]  %s15, 2048, %s17, [#allocation4], 128, 128, 8
    $region5: #{tpu_custom_call.1} parent=1 // pred_fallthru
      _
    // Predicated region
    $region6: #{tpu_custom_call.1} parent=1 // pred_check
      _
    $region7: #{tpu_custom_call.1} parent=1 // pred_check_branch
      %24 = sbr.rel (0) target = $region9
    $region8: #{tpu_custom_call.1} parent=1 // pred_region
      %26 = vsyncadd [#allocation7], 0
      %s27 = sshll.u32 %s1, 4
      %s28 = int_to_ptr.hbm [resolvable:$true] %s27
      %s29 = sshll.u32 [#allocation6], 4
      %s30 = int_to_ptr.vmem [resolvable:$true] %s29
      %35 = dma.hbm_to_vmem [thread:$0]  %s28, 2048, %s30, [#allocation7], 128, 128, 8
    $region9: #{tpu_custom_call.1} parent=1 // pred_fallthru
      _
    // Predicated region
    $region10: #{tpu_custom_call.1} parent=1 // pred_check
      _
    $region11: #{tpu_custom_call.1} parent=1 // pred_check_branch
      %37 = sbr.rel (0) target = $region13
    $region12: #{tpu_custom_call.1} parent=1 // pred_region
      %39 = dma.done [#allocation4], 2048
    $region13: #{tpu_custom_call.1} parent=1 // pred_fallthru
      _
    // Predicated region
    $region14: #{tpu_custom_call.1} parent=1 // pred_check
      _
    $region15: #{tpu_custom_call.1} parent=1 // pred_check_branch
      %41 = sbr.rel (0) target = $region17
    $region16: #{tpu_custom_call.1} parent=1 // pred_region
      %43 = dma.done [#allocation7], 2048
    $region17: #{tpu_custom_call.1} parent=1 // pred_fallthru
      _
    %v44 = vld [vmem:[#allocation3] sm:$0xff]
    %v45 = vld [vmem:[#allocation3 + $0x8] sm:$0xff]
    %v46 = vld [vmem:[#allocation3 + $0x10] sm:$0xff]
    %v47 = vld [vmem:[#allocation3 + $0x18] sm:$0xff]
    %v48 = vld [vmem:[#allocation3 + $0x20] sm:$0xff]
    %v49 = vld [vmem:[#allocation3 + $0x28] sm:$0xff]
    %v50 = vld [vmem:[#allocation3 + $0x30] sm:$0xff]
    %v51 = vld [vmem:[#allocation3 + $0x38] sm:$0xff]
    %v52 = vld [vmem:[#allocation3 + $0x40] sm:$0xff]
    %v53 = vld [vmem:[#allocation3 + $0x48] sm:$0xff]
    %v54 = vld [vmem:[#allocation3 + $0x50] sm:$0xff]
    %v55 = vld [vmem:[#allocation3 + $0x58] sm:$0xff]
    %v56 = vld [vmem:[#allocation3 + $0x60] sm:$0xff]
    %v57 = vld [vmem:[#allocation3 + $0x68] sm:$0xff]
    %v58 = vld [vmem:[#allocation3 + $0x70] sm:$0xff]
    %v59 = vld [vmem:[#allocation3 + $0x78] sm:$0xff]
    %v60 = vld [vmem:[#allocation6] sm:$0xff]
    %v61 = vld [vmem:[#allocation6 + $0x8] sm:$0xff]
    %v62 = vld [vmem:[#allocation6 + $0x10] sm:$0xff]
    %v63 = vld [vmem:[#allocation6 + $0x18] sm:$0xff]
    %v64 = vld [vmem:[#allocation6 + $0x20] sm:$0xff]
    %v65 = vld [vmem:[#allocation6 + $0x28] sm:$0xff]
    %v66 = vld [vmem:[#allocation6 + $0x30] sm:$0xff]
    %v67 = vld [vmem:[#allocation6 + $0x38] sm:$0xff]
    %v68 = vld [vmem:[#allocation6 + $0x40] sm:$0xff]
    %v69 = vld [vmem:[#allocation6 + $0x48] sm:$0xff]
    %v70 = vld [vmem:[#allocation6 + $0x50] sm:$0xff]
    %v71 = vld [vmem:[#allocation6 + $0x58] sm:$0xff]
    %v72 = vld [vmem:[#allocation6 + $0x60] sm:$0xff]
    %v73 = vld [vmem:[#allocation6 + $0x68] sm:$0xff]
    %v74 = vld [vmem:[#allocation6 + $0x70] sm:$0xff]
    %v75 = vld [vmem:[#allocation6 + $0x78] sm:$0xff]
    %v76 = vsub.f32 %v44, %v60
    %v77 = vsub.f32 %v45, %v61
    %v78 = vsub.f32 %v46, %v62
    %v79 = vsub.f32 %v47, %v63
    %v80 = vsub.f32 %v48, %v64
    %v81 = vsub.f32 %v49, %v65
    %v82 = vsub.f32 %v50, %v66
    %v83 = vsub.f32 %v51, %v67
    %v84 = vsub.f32 %v52, %v68
    %v85 = vsub.f32 %v53, %v69
    %v86 = vsub.f32 %v54, %v70
    %v87 = vsub.f32 %v55, %v71
    %v88 = vsub.f32 %v56, %v72
    %v89 = vsub.f32 %v57, %v73
    %v90 = vsub.f32 %v58, %v74
    %v91 = vsub.f32 %v59, %v75
    %vm92 = vcmask 139264
    %93 = vst.msk [vmem:[#allocation2] sm:$0x1] %vm92, 0.0
    %94 = vst.msk [vmem:[#allocation2 + $0x18] sm:$0x1] %vm92, 0.0
    %95 = vst.msk [vmem:[#allocation2 + $0x30] sm:$0x1] %vm92, 0.0
    %96 = vst.msk [vmem:[#allocation2 + $0x48] sm:$0x1] %vm92, 0.0
    %97 = vst.msk [vmem:[#allocation2 + $0x60] sm:$0x1] %vm92, 0.0
    %98 = vst.msk [vmem:[#allocation2 + $0x78] sm:$0x1] %vm92, 0.0
    %99 = vst.msk [vmem:[#allocation2 + $0x90] sm:$0x1] %vm92, 0.0
    %100 = vst.msk [vmem:[#allocation2 + $0xa8] sm:$0x1] %vm92, 0.0
    %101 = vst.msk [vmem:[#allocation2 + $0x11] sm:$0x1] %vm92, 0.0
    %102 = vst.msk [vmem:[#allocation2 + $0x29] sm:$0x1] %vm92, 0.0
    %103 = vst.msk [vmem:[#allocation2 + $0x41] sm:$0x1] %vm92, 0.0
    %104 = vst.msk [vmem:[#allocation2 + $0x59] sm:$0x1] %vm92, 0.0
    %105 = vst.msk [vmem:[#allocation2 + $0x71] sm:$0x1] %vm92, 0.0
    %106 = vst.msk [vmem:[#allocation2 + $0x89] sm:$0x1] %vm92, 0.0
    %107 = vst.msk [vmem:[#allocation2 + $0xa1] sm:$0x1] %vm92, 0.0
    %108 = vst.msk [vmem:[#allocation2 + $0xb9] sm:$0x1] %vm92, 0.0
    %vm109 = vcmask 7168
    %110 = vst.msk [vmem:[#allocation2] sm:$0xff] %vm109, 0.0
    %111 = vst.msk [vmem:[#allocation2 + $0x8] sm:$0xff] %vm109, 0.0
    %vm112 = vcmask 1024
    %113 = vst.msk [vmem:[#allocation2 + $0x10] sm:$0x3] %vm112, 0.0
    %114 = vst.msk [vmem:[#allocation2 + $0x18] sm:$0xff] %vm109, 0.0
    %115 = vst.msk [vmem:[#allocation2 + $0x20] sm:$0xff] %vm109, 0.0
    %116 = vst.msk [vmem:[#allocation2 + $0x28] sm:$0x3] %vm112, 0.0
    %117 = vst.msk [vmem:[#allocation2 + $0x30] sm:$0xff] %vm109, 0.0
    %118 = vst.msk [vmem:[#allocation2 + $0x38] sm:$0xff] %vm109, 0.0
    %119 = vst.msk [vmem:[#allocation2 + $0x40] sm:$0x3] %vm112, 0.0
    %120 = vst.msk [vmem:[#allocation2 + $0x48] sm:$0xff] %vm109, 0.0
    %121 = vst.msk [vmem:[#allocation2 + $0x50] sm:$0xff] %vm109, 0.0
    %122 = vst.msk [vmem:[#allocation2 + $0x58] sm:$0x3] %vm112, 0.0
    %123 = vst.msk [vmem:[#allocation2 + $0x60] sm:$0xff] %vm109, 0.0
    %124 = vst.msk [vmem:[#allocation2 + $0x68] sm:$0xff] %vm109, 0.0
    %125 = vst.msk [vmem:[#allocation2 + $0x70] sm:$0x3] %vm112, 0.0
    %126 = vst.msk [vmem:[#allocation2 + $0x78] sm:$0xff] %vm109, 0.0
    %127 = vst.msk [vmem:[#allocation2 + $0x80] sm:$0xff] %vm109, 0.0
    %128 = vst.msk [vmem:[#allocation2 + $0x88] sm:$0x3] %vm112, 0.0
    %129 = vst.msk [vmem:[#allocation2 + $0x90] sm:$0xff] %vm109, 0.0
    %130 = vst.msk [vmem:[#allocation2 + $0x98] sm:$0xff] %vm109, 0.0
    %131 = vst.msk [vmem:[#allocation2 + $0xa0] sm:$0x3] %vm112, 0.0
    %132 = vst.msk [vmem:[#allocation2 + $0xa8] sm:$0xff] %vm109, 0.0
    %133 = vst.msk [vmem:[#allocation2 + $0xb0] sm:$0xff] %vm109, 0.0
    %134 = vst.msk [vmem:[#allocation2 + $0xb8] sm:$0x3] %vm112, 0.0
    %vm135 = vcmask 146568
    %136 = vst.msk [vmem:[#allocation2] sm:$0xff] %vm135, 0.0
    %137 = vst.msk [vmem:[#allocation2 + $0x8] sm:$0xff] %vm135, 0.0
    %vm138 = vcmask 140424
    %139 = vst.msk [vmem:[#allocation2 + $0x10] sm:$0x3] %vm138, 0.0
    %140 = vst.msk [vmem:[#allocation2 + $0x18] sm:$0xff] %vm135, 0.0
    %141 = vst.msk [vmem:[#allocation2 + $0x20] sm:$0xff] %vm135, 0.0
    %142 = vst.msk [vmem:[#allocation2 + $0x28] sm:$0x3] %vm138, 0.0
    %143 = vst.msk [vmem:[#allocation2 + $0x30] sm:$0xff] %vm135, 0.0
    %144 = vst.msk [vmem:[#allocation2 + $0x38] sm:$0xff] %vm135, 0.0
    %145 = vst.msk [vmem:[#allocation2 + $0x40] sm:$0x3] %vm138, 0.0
    %146 = vst.msk [vmem:[#allocation2 + $0x48] sm:$0xff] %vm135, 0.0
    %147 = vst.msk [vmem:[#allocation2 + $0x50] sm:$0xff] %vm135, 0.0
    %148 = vst.msk [vmem:[#allocation2 + $0x58] sm:$0x3] %vm138, 0.0
    %149 = vst.msk [vmem:[#allocation2 + $0x60] sm:$0xff] %vm135, 0.0
    %150 = vst.msk [vmem:[#allocation2 + $0x68] sm:$0xff] %vm135, 0.0
    %151 = vst.msk [vmem:[#allocation2 + $0x70] sm:$0x3] %vm138, 0.0
    %152 = vst.msk [vmem:[#allocation2 + $0x78] sm:$0xff] %vm135, 0.0
    %153 = vst.msk [vmem:[#allocation2 + $0x80] sm:$0xff] %vm135, 0.0
    %154 = vst.msk [vmem:[#allocation2 + $0x88] sm:$0x3] %vm138, 0.0
    %155 = vst.msk [vmem:[#allocation2 + $0x90] sm:$0xff] %vm135, 0.0
    %156 = vst.msk [vmem:[#allocation2 + $0x98] sm:$0xff] %vm135, 0.0
    %157 = vst.msk [vmem:[#allocation2 + $0xa0] sm:$0x3] %vm138, 0.0
    %158 = vst.msk [vmem:[#allocation2 + $0xa8] sm:$0xff] %vm135, 0.0
    %159 = vst.msk [vmem:[#allocation2 + $0xb0] sm:$0xff] %vm135, 0.0
    %160 = vst.msk [vmem:[#allocation2 + $0xb8] sm:$0x3] %vm138, 0.0
    %177 = vrot.lane.b32.xlu0 %v76, 1
    %v178 = vpop.permute.xlu0 %177
    %179 = vrot.lane.b32.xlu0 %v77, 1
    %v180 = vpop.permute.xlu0 %179
    %181 = vrot.lane.b32.xlu0 %v78, 1
    %v182 = vpop.permute.xlu0 %181
    %183 = vrot.lane.b32.xlu0 %v79, 1
    %v184 = vpop.permute.xlu0 %183
    %185 = vrot.lane.b32.xlu0 %v80, 1
    %v186 = vpop.permute.xlu0 %185
    %187 = vrot.lane.b32.xlu0 %v81, 1
    %v188 = vpop.permute.xlu0 %187
    %189 = vrot.lane.b32.xlu0 %v82, 1
    %v190 = vpop.permute.xlu0 %189
    %191 = vrot.lane.b32.xlu0 %v83, 1
    %v192 = vpop.permute.xlu0 %191
    %193 = vrot.lane.b32.xlu0 %v84, 1
    %v194 = vpop.permute.xlu0 %193
    %195 = vrot.lane.b32.xlu0 %v85, 1
    %v196 = vpop.permute.xlu0 %195
    %197 = vrot.lane.b32.xlu0 %v86, 1
    %v198 = vpop.permute.xlu0 %197
    %199 = vrot.lane.b32.xlu0 %v87, 1
    %v200 = vpop.permute.xlu0 %199
    %201 = vrot.lane.b32.xlu0 %v88, 1
    %v202 = vpop.permute.xlu0 %201
    %203 = vrot.lane.b32.xlu0 %v89, 1
    %v204 = vpop.permute.xlu0 %203
    %205 = vrot.lane.b32.xlu0 %v90, 1
    %v206 = vpop.permute.xlu0 %205
    %207 = vrot.lane.b32.xlu0 %v91, 1
    %v208 = vpop.permute.xlu0 %207
    %vm225 = vcmask 138248
    %226 = vst.msk [vmem:[#allocation2 + $0x1] sm:$0xff] %vm225, %v178
    %227 = vst.msk [vmem:[#allocation2 + $0x9] sm:$0xff] %vm225, %v180
    %228 = vst.msk [vmem:[#allocation2 + $0x19] sm:$0xff] %vm225, %v182
    %229 = vst.msk [vmem:[#allocation2 + $0x21] sm:$0xff] %vm225, %v184
    %230 = vst.msk [vmem:[#allocation2 + $0x31] sm:$0xff] %vm225, %v186
    %231 = vst.msk [vmem:[#allocation2 + $0x39] sm:$0xff] %vm225, %v188
    %232 = vst.msk [vmem:[#allocation2 + $0x49] sm:$0xff] %vm225, %v190
    %233 = vst.msk [vmem:[#allocation2 + $0x51] sm:$0xff] %vm225, %v192
    %234 = vst.msk [vmem:[#allocation2 + $0x61] sm:$0xff] %vm225, %v194
    %235 = vst.msk [vmem:[#allocation2 + $0x69] sm:$0xff] %vm225, %v196
    %236 = vst.msk [vmem:[#allocation2 + $0x79] sm:$0xff] %vm225, %v198
    %237 = vst.msk [vmem:[#allocation2 + $0x81] sm:$0xff] %vm225, %v200
    %238 = vst.msk [vmem:[#allocation2 + $0x91] sm:$0xff] %vm225, %v202
    %239 = vst.msk [vmem:[#allocation2 + $0x99] sm:$0xff] %vm225, %v204
    %240 = vst.msk [vmem:[#allocation2 + $0xa9] sm:$0xff] %vm225, %v206
    %241 = vst.msk [vmem:[#allocation2 + $0xb1] sm:$0xff] %vm225, %v208
    %v242 = vld [vmem:[#allocation2] sm:$0xff]
    %v243 = vld [vmem:[#allocation2 + $0x8] sm:$0xff]
    %v244 = vld [vmem:[#allocation2 + $0x18] sm:$0xff]
    %v245 = vld [vmem:[#allocation2 + $0x20] sm:$0xff]
    %v246 = vld [vmem:[#allocation2 + $0x30] sm:$0xff]
    %v247 = vld [vmem:[#allocation2 + $0x38] sm:$0xff]
    %v248 = vld [vmem:[#allocation2 + $0x48] sm:$0xff]
    %v249 = vld [vmem:[#allocation2 + $0x50] sm:$0xff]
    %v250 = vld [vmem:[#allocation2 + $0x60] sm:$0xff]
    %v251 = vld [vmem:[#allocation2 + $0x68] sm:$0xff]
    %v252 = vld [vmem:[#allocation2 + $0x78] sm:$0xff]
    %v253 = vld [vmem:[#allocation2 + $0x80] sm:$0xff]
    %v254 = vld [vmem:[#allocation2 + $0x90] sm:$0xff]
    %v255 = vld [vmem:[#allocation2 + $0x98] sm:$0xff]
    %v256 = vld [vmem:[#allocation2 + $0xa8] sm:$0xff]
    %v257 = vld [vmem:[#allocation2 + $0xb0] sm:$0xff]
    %v258 = vld [vmem:[#allocation2 + $0x1] sm:$0xff]
    %v259 = vld [vmem:[#allocation2 + $0x9] sm:$0xff]
    %v260 = vld [vmem:[#allocation2 + $0x19] sm:$0xff]
    %v261 = vld [vmem:[#allocation2 + $0x21] sm:$0xff]
    %v262 = vld [vmem:[#allocation2 + $0x31] sm:$0xff]
    %v263 = vld [vmem:[#allocation2 + $0x39] sm:$0xff]
    %v264 = vld [vmem:[#allocation2 + $0x49] sm:$0xff]
    %v265 = vld [vmem:[#allocation2 + $0x51] sm:$0xff]
    %v266 = vld [vmem:[#allocation2 + $0x61] sm:$0xff]
    %v267 = vld [vmem:[#allocation2 + $0x69] sm:$0xff]
    %v268 = vld [vmem:[#allocation2 + $0x79] sm:$0xff]
    %v269 = vld [vmem:[#allocation2 + $0x81] sm:$0xff]
    %v270 = vld [vmem:[#allocation2 + $0x91] sm:$0xff]
    %v271 = vld [vmem:[#allocation2 + $0x99] sm:$0xff]
    %v272 = vld [vmem:[#allocation2 + $0xa9] sm:$0xff]
    %v273 = vld [vmem:[#allocation2 + $0xb1] sm:$0xff]
    %v274 = vld [vmem:[#allocation2 + $0x2] sm:$0xff]
    %v275 = vld [vmem:[#allocation2 + $0xa] sm:$0xff]
    %v276 = vld [vmem:[#allocation2 + $0x1a] sm:$0xff]
    %v277 = vld [vmem:[#allocation2 + $0x22] sm:$0xff]
    %v278 = vld [vmem:[#allocation2 + $0x32] sm:$0xff]
    %v279 = vld [vmem:[#allocation2 + $0x3a] sm:$0xff]
    %v280 = vld [vmem:[#allocation2 + $0x4a] sm:$0xff]
    %v281 = vld [vmem:[#allocation2 + $0x52] sm:$0xff]
    %v282 = vld [vmem:[#allocation2 + $0x62] sm:$0xff]
    %v283 = vld [vmem:[#allocation2 + $0x6a] sm:$0xff]
    %v284 = vld [vmem:[#allocation2 + $0x7a] sm:$0xff]
    %v285 = vld [vmem:[#allocation2 + $0x82] sm:$0xff]
    %v286 = vld [vmem:[#allocation2 + $0x92] sm:$0xff]
    %v287 = vld [vmem:[#allocation2 + $0x9a] sm:$0xff]
    %v288 = vld [vmem:[#allocation2 + $0xaa] sm:$0xff]
    %v289 = vld [vmem:[#allocation2 + $0xb2] sm:$0xff]
    %v290 = vmul.f32 %v258, 2.0
    %v291 = vmul.f32 %v259, 2.0
    %v292 = vmul.f32 %v260, 2.0
    %v293 = vmul.f32 %v261, 2.0
    %v294 = vmul.f32 %v262, 2.0
    %v295 = vmul.f32 %v263, 2.0
    %v296 = vmul.f32 %v264, 2.0
    %v297 = vmul.f32 %v265, 2.0
    %v298 = vmul.f32 %v266, 2.0
    %v299 = vmul.f32 %v267, 2.0
    %v300 = vmul.f32 %v268, 2.0
    %v301 = vmul.f32 %v269, 2.0
    %v302 = vmul.f32 %v270, 2.0
    %v303 = vmul.f32 %v271, 2.0
    %v304 = vmul.f32 %v272, 2.0
    %v305 = vmul.f32 %v273, 2.0
    %v306 = vadd.f32 %v242, %v290
    %v307 = vadd.f32 %v243, %v291
    %v308 = vadd.f32 %v244, %v292
    %v309 = vadd.f32 %v245, %v293
    %v310 = vadd.f32 %v246, %v294
    %v311 = vadd.f32 %v247, %v295
    %v312 = vadd.f32 %v248, %v296
    %v313 = vadd.f32 %v249, %v297
    %v314 = vadd.f32 %v250, %v298
    %v315 = vadd.f32 %v251, %v299
    %v316 = vadd.f32 %v252, %v300
    %v317 = vadd.f32 %v253, %v301
    %v318 = vadd.f32 %v254, %v302
    %v319 = vadd.f32 %v255, %v303
    %v320 = vadd.f32 %v256, %v304
    %v321 = vadd.f32 %v257, %v305
    %v322 = vadd.f32 %v306, %v274
    %v323 = vadd.f32 %v307, %v275
    %v324 = vadd.f32 %v308, %v276
    %v325 = vadd.f32 %v309, %v277
    %v326 = vadd.f32 %v310, %v278
    %v327 = vadd.f32 %v311, %v279
    %v328 = vadd.f32 %v312, %v280
    %v329 = vadd.f32 %v313, %v281
    %v330 = vadd.f32 %v314, %v282
    %v331 = vadd.f32 %v315, %v283
    %v332 = vadd.f32 %v316, %v284
    %v333 = vadd.f32 %v317, %v285
    %v334 = vadd.f32 %v318, %v286
    %v335 = vadd.f32 %v319, %v287
    %v336 = vadd.f32 %v320, %v288
    %v337 = vadd.f32 %v321, %v289
    %v338 = vsub.f32 %v274, %v242
    %v339 = vsub.f32 %v275, %v243
    %v340 = vsub.f32 %v276, %v244
    %v341 = vsub.f32 %v277, %v245
    %v342 = vsub.f32 %v278, %v246
    %v343 = vsub.f32 %v279, %v247
    %v344 = vsub.f32 %v280, %v248
    %v345 = vsub.f32 %v281, %v249
    %v346 = vsub.f32 %v282, %v250
    %v347 = vsub.f32 %v283, %v251
    %v348 = vsub.f32 %v284, %v252
    %v349 = vsub.f32 %v285, %v253
    %v350 = vsub.f32 %v286, %v254
    %v351 = vsub.f32 %v287, %v255
    %v352 = vsub.f32 %v288, %v256
    %v353 = vsub.f32 %v289, %v257
    %370 = vrot.lane.b32.xlu0 %v322, 2
    %v371 = vpop.permute.xlu0 %370
    %372 = vrot.lane.b32.xlu0 %v323, 2
    %v373 = vpop.permute.xlu0 %372
    %374 = vrot.lane.b32.xlu0 %v324, 2
    %v375 = vpop.permute.xlu0 %374
    %376 = vrot.lane.b32.xlu0 %v325, 2
    %v377 = vpop.permute.xlu0 %376
    %378 = vrot.lane.b32.xlu0 %v326, 2
    %v379 = vpop.permute.xlu0 %378
    %380 = vrot.lane.b32.xlu0 %v327, 2
    %v381 = vpop.permute.xlu0 %380
    %382 = vrot.lane.b32.xlu0 %v328, 2
    %v383 = vpop.permute.xlu0 %382
    %384 = vrot.lane.b32.xlu0 %v329, 2
    %v385 = vpop.permute.xlu0 %384
    %386 = vrot.lane.b32.xlu0 %v330, 2
    %v387 = vpop.permute.xlu0 %386
    %388 = vrot.lane.b32.xlu0 %v331, 2
    %v389 = vpop.permute.xlu0 %388
    %390 = vrot.lane.b32.xlu0 %v332, 2
    %v391 = vpop.permute.xlu0 %390
    %392 = vrot.lane.b32.xlu0 %v333, 2
    %v393 = vpop.permute.xlu0 %392
    %394 = vrot.lane.b32.xlu0 %v334, 2
    %v395 = vpop.permute.xlu0 %394
    %396 = vrot.lane.b32.xlu0 %v335, 2
    %v397 = vpop.permute.xlu0 %396
    %398 = vrot.lane.b32.xlu0 %v336, 2
    %v399 = vpop.permute.xlu0 %398
    %400 = vrot.lane.b32.xlu0 %v337, 2
    %v401 = vpop.permute.xlu0 %400
    %v418 = vsub.f32 %v322, %v371
    %v419 = vsub.f32 %v323, %v373
    %v420 = vsub.f32 %v324, %v375
    %v421 = vsub.f32 %v325, %v377
    %v422 = vsub.f32 %v326, %v379
    %v423 = vsub.f32 %v327, %v381
    %v424 = vsub.f32 %v328, %v383
    %v425 = vsub.f32 %v329, %v385
    %v426 = vsub.f32 %v330, %v387
    %v427 = vsub.f32 %v331, %v389
    %v428 = vsub.f32 %v332, %v391
    %v429 = vsub.f32 %v333, %v393
    %v430 = vsub.f32 %v334, %v395
    %v431 = vsub.f32 %v335, %v397
    %v432 = vsub.f32 %v336, %v399
    %v433 = vsub.f32 %v337, %v401
    %v434 = vmul.f32 %v338, 2.0
    %v435 = vmul.f32 %v339, 2.0
    %v436 = vmul.f32 %v340, 2.0
    %v437 = vmul.f32 %v341, 2.0
    %v438 = vmul.f32 %v342, 2.0
    %v439 = vmul.f32 %v343, 2.0
    %v440 = vmul.f32 %v344, 2.0
    %v441 = vmul.f32 %v345, 2.0
    %v442 = vmul.f32 %v346, 2.0
    %v443 = vmul.f32 %v347, 2.0
    %v444 = vmul.f32 %v348, 2.0
    %v445 = vmul.f32 %v349, 2.0
    %v446 = vmul.f32 %v350, 2.0
    %v447 = vmul.f32 %v351, 2.0
    %v448 = vmul.f32 %v352, 2.0
    %v449 = vmul.f32 %v353, 2.0
    %466 = vrot.lane.b32.xlu0 %v434, 127
    %v467 = vpop.permute.xlu0 %466
    %468 = vrot.lane.b32.xlu0 %v435, 127
    %v469 = vpop.permute.xlu0 %468
    %470 = vrot.lane.b32.xlu0 %v436, 127
    %v471 = vpop.permute.xlu0 %470
    %472 = vrot.lane.b32.xlu0 %v437, 127
    %v473 = vpop.permute.xlu0 %472
    %474 = vrot.lane.b32.xlu0 %v438, 127
    %v475 = vpop.permute.xlu0 %474
    %476 = vrot.lane.b32.xlu0 %v439, 127
    %v477 = vpop.permute.xlu0 %476
    %478 = vrot.lane.b32.xlu0 %v440, 127
    %v479 = vpop.permute.xlu0 %478
    %480 = vrot.lane.b32.xlu0 %v441, 127
    %v481 = vpop.permute.xlu0 %480
    %482 = vrot.lane.b32.xlu0 %v442, 127
    %v483 = vpop.permute.xlu0 %482
    %484 = vrot.lane.b32.xlu0 %v443, 127
    %v485 = vpop.permute.xlu0 %484
    %486 = vrot.lane.b32.xlu0 %v444, 127
    %v487 = vpop.permute.xlu0 %486
    %488 = vrot.lane.b32.xlu0 %v445, 127
    %v489 = vpop.permute.xlu0 %488
    %490 = vrot.lane.b32.xlu0 %v446, 127
    %v491 = vpop.permute.xlu0 %490
    %492 = vrot.lane.b32.xlu0 %v447, 127
    %v493 = vpop.permute.xlu0 %492
    %494 = vrot.lane.b32.xlu0 %v448, 127
    %v495 = vpop.permute.xlu0 %494
    %496 = vrot.lane.b32.xlu0 %v449, 127
    %v497 = vpop.permute.xlu0 %496
    %v514 = vadd.f32 %v338, %v467
    %v515 = vadd.f32 %v339, %v469
    %v516 = vadd.f32 %v340, %v471
    %v517 = vadd.f32 %v341, %v473
    %v518 = vadd.f32 %v342, %v475
    %v519 = vadd.f32 %v343, %v477
    %v520 = vadd.f32 %v344, %v479
    %v521 = vadd.f32 %v345, %v481
    %v522 = vadd.f32 %v346, %v483
    %v523 = vadd.f32 %v347, %v485
    %v524 = vadd.f32 %v348, %v487
    %v525 = vadd.f32 %v349, %v489
    %v526 = vadd.f32 %v350, %v491
    %v527 = vadd.f32 %v351, %v493
    %v528 = vadd.f32 %v352, %v495
    %v529 = vadd.f32 %v353, %v497
    %546 = vrot.lane.b32.xlu0 %v338, 126
    %v547 = vpop.permute.xlu0 %546
    %548 = vrot.lane.b32.xlu0 %v339, 126
    %v549 = vpop.permute.xlu0 %548
    %550 = vrot.lane.b32.xlu0 %v340, 126
    %v551 = vpop.permute.xlu0 %550
    %552 = vrot.lane.b32.xlu0 %v341, 126
    %v553 = vpop.permute.xlu0 %552
    %554 = vrot.lane.b32.xlu0 %v342, 126
    %v555 = vpop.permute.xlu0 %554
    %556 = vrot.lane.b32.xlu0 %v343, 126
    %v557 = vpop.permute.xlu0 %556
    %558 = vrot.lane.b32.xlu0 %v344, 126
    %v559 = vpop.permute.xlu0 %558
    %560 = vrot.lane.b32.xlu0 %v345, 126
    %v561 = vpop.permute.xlu0 %560
    %562 = vrot.lane.b32.xlu0 %v346, 126
    %v563 = vpop.permute.xlu0 %562
    %564 = vrot.lane.b32.xlu0 %v347, 126
    %v565 = vpop.permute.xlu0 %564
    %566 = vrot.lane.b32.xlu0 %v348, 126
    %v567 = vpop.permute.xlu0 %566
    %568 = vrot.lane.b32.xlu0 %v349, 126
    %v569 = vpop.permute.xlu0 %568
    %570 = vrot.lane.b32.xlu0 %v350, 126
    %v571 = vpop.permute.xlu0 %570
    %572 = vrot.lane.b32.xlu0 %v351, 126
    %v573 = vpop.permute.xlu0 %572
    %574 = vrot.lane.b32.xlu0 %v352, 126
    %v575 = vpop.permute.xlu0 %574
    %576 = vrot.lane.b32.xlu0 %v353, 126
    %v577 = vpop.permute.xlu0 %576
    %v594 = vadd.f32 %v514, %v547
    %v595 = vadd.f32 %v515, %v549
    %v596 = vadd.f32 %v516, %v551
    %v597 = vadd.f32 %v517, %v553
    %v598 = vadd.f32 %v518, %v555
    %v599 = vadd.f32 %v519, %v557
    %v600 = vadd.f32 %v520, %v559
    %v601 = vadd.f32 %v521, %v561
    %v602 = vadd.f32 %v522, %v563
    %v603 = vadd.f32 %v523, %v565
    %v604 = vadd.f32 %v524, %v567
    %v605 = vadd.f32 %v525, %v569
    %v606 = vadd.f32 %v526, %v571
    %v607 = vadd.f32 %v527, %v573
    %v608 = vadd.f32 %v528, %v575
    %v609 = vadd.f32 %v529, %v577
    %v610 = vand.u32 2147483647, %v418
    %v611 = vand.u32 2147483647, %v419
    %v612 = vand.u32 2147483647, %v420
    %v613 = vand.u32 2147483647, %v421
    %v614 = vand.u32 2147483647, %v422
    %v615 = vand.u32 2147483647, %v423
    %v616 = vand.u32 2147483647, %v424
    %v617 = vand.u32 2147483647, %v425
    %v618 = vand.u32 2147483647, %v426
    %v619 = vand.u32 2147483647, %v427
    %v620 = vand.u32 2147483647, %v428
    %v621 = vand.u32 2147483647, %v429
    %v622 = vand.u32 2147483647, %v430
    %v623 = vand.u32 2147483647, %v431
    %v624 = vand.u32 2147483647, %v432
    %v625 = vand.u32 2147483647, %v433
    %v626 = vmul.f32 %v610, 4.0
    %v627 = vmul.f32 %v611, 4.0
    %v628 = vmul.f32 %v612, 4.0
    %v629 = vmul.f32 %v613, 4.0
    %v630 = vmul.f32 %v614, 4.0
    %v631 = vmul.f32 %v615, 4.0
    %v632 = vmul.f32 %v616, 4.0
    %v633 = vmul.f32 %v617, 4.0
    %v634 = vmul.f32 %v618, 4.0
    %v635 = vmul.f32 %v619, 4.0
    %v636 = vmul.f32 %v620, 4.0
    %v637 = vmul.f32 %v621, 4.0
    %v638 = vmul.f32 %v622, 4.0
    %v639 = vmul.f32 %v623, 4.0
    %v640 = vmul.f32 %v624, 4.0
    %v641 = vmul.f32 %v625, 4.0
    %v642 = vadd.f32 %v626, 1.0
    %v643 = vadd.f32 %v627, 1.0
    %v644 = vadd.f32 %v628, 1.0
    %v645 = vadd.f32 %v629, 1.0
    %v646 = vadd.f32 %v630, 1.0
    %v647 = vadd.f32 %v631, 1.0
    %v648 = vadd.f32 %v632, 1.0
    %v649 = vadd.f32 %v633, 1.0
    %v650 = vadd.f32 %v634, 1.0
    %v651 = vadd.f32 %v635, 1.0
    %v652 = vadd.f32 %v636, 1.0
    %v653 = vadd.f32 %v637, 1.0
    %v654 = vadd.f32 %v638, 1.0
    %v655 = vadd.f32 %v639, 1.0
    %v656 = vadd.f32 %v640, 1.0
    %v657 = vadd.f32 %v641, 1.0
    %v658 = vand.u32 2147483647, %v594
    %v659 = vand.u32 2147483647, %v595
    %v660 = vand.u32 2147483647, %v596
    %v661 = vand.u32 2147483647, %v597
    %v662 = vand.u32 2147483647, %v598
    %v663 = vand.u32 2147483647, %v599
    %v664 = vand.u32 2147483647, %v600
    %v665 = vand.u32 2147483647, %v601
    %v666 = vand.u32 2147483647, %v602
    %v667 = vand.u32 2147483647, %v603
    %v668 = vand.u32 2147483647, %v604
    %v669 = vand.u32 2147483647, %v605
    %v670 = vand.u32 2147483647, %v606
    %v671 = vand.u32 2147483647, %v607
    %v672 = vand.u32 2147483647, %v608
    %v673 = vand.u32 2147483647, %v609
    %v674 = vmul.f32 %v658, 4.0
    %v675 = vmul.f32 %v659, 4.0
    %v676 = vmul.f32 %v660, 4.0
    %v677 = vmul.f32 %v661, 4.0
    %v678 = vmul.f32 %v662, 4.0
    %v679 = vmul.f32 %v663, 4.0
    %v680 = vmul.f32 %v664, 4.0
    %v681 = vmul.f32 %v665, 4.0
    %v682 = vmul.f32 %v666, 4.0
    %v683 = vmul.f32 %v667, 4.0
    %v684 = vmul.f32 %v668, 4.0
    %v685 = vmul.f32 %v669, 4.0
    %v686 = vmul.f32 %v670, 4.0
    %v687 = vmul.f32 %v671, 4.0
    %v688 = vmul.f32 %v672, 4.0
    %v689 = vmul.f32 %v673, 4.0
    %v690 = vadd.f32 %v674, 1.0
    %v691 = vadd.f32 %v675, 1.0
    %v692 = vadd.f32 %v676, 1.0
    %v693 = vadd.f32 %v677, 1.0
    %v694 = vadd.f32 %v678, 1.0
    %v695 = vadd.f32 %v679, 1.0
    %v696 = vadd.f32 %v680, 1.0
    %v697 = vadd.f32 %v681, 1.0
    %v698 = vadd.f32 %v682, 1.0
    %v699 = vadd.f32 %v683, 1.0
    %v700 = vadd.f32 %v684, 1.0
    %v701 = vadd.f32 %v685, 1.0
    %v702 = vadd.f32 %v686, 1.0
    %v703 = vadd.f32 %v687, 1.0
    %v704 = vadd.f32 %v688, 1.0
    %v705 = vadd.f32 %v689, 1.0
    %722 = vrot.lane.b32.xlu0 %v690, 2
    %v723 = vpop.permute.xlu0 %722
    %724 = vrot.lane.b32.xlu0 %v691, 2
    %v725 = vpop.permute.xlu0 %724
    %726 = vrot.lane.b32.xlu0 %v692, 2
    %v727 = vpop.permute.xlu0 %726
    %728 = vrot.lane.b32.xlu0 %v693, 2
    %v729 = vpop.permute.xlu0 %728
    %730 = vrot.lane.b32.xlu0 %v694, 2
    %v731 = vpop.permute.xlu0 %730
    %732 = vrot.lane.b32.xlu0 %v695, 2
    %v733 = vpop.permute.xlu0 %732
    %734 = vrot.lane.b32.xlu0 %v696, 2
    %v735 = vpop.permute.xlu0 %734
    %736 = vrot.lane.b32.xlu0 %v697, 2
    %v737 = vpop.permute.xlu0 %736
    %738 = vrot.lane.b32.xlu0 %v698, 2
    %v739 = vpop.permute.xlu0 %738
    %740 = vrot.lane.b32.xlu0 %v699, 2
    %v741 = vpop.permute.xlu0 %740
    %742 = vrot.lane.b32.xlu0 %v700, 2
    %v743 = vpop.permute.xlu0 %742
    %744 = vrot.lane.b32.xlu0 %v701, 2
    %v745 = vpop.permute.xlu0 %744
    %746 = vrot.lane.b32.xlu0 %v702, 2
    %v747 = vpop.permute.xlu0 %746
    %748 = vrot.lane.b32.xlu0 %v703, 2
    %v749 = vpop.permute.xlu0 %748
    %750 = vrot.lane.b32.xlu0 %v704, 2
    %v751 = vpop.permute.xlu0 %750
    %752 = vrot.lane.b32.xlu0 %v705, 2
    %v753 = vpop.permute.xlu0 %752
    %v770 = vmul.f32 %v642, %v723
    %v771 = vmul.f32 %v643, %v725
    %v772 = vmul.f32 %v644, %v727
    %v773 = vmul.f32 %v645, %v729
    %v774 = vmul.f32 %v646, %v731
    %v775 = vmul.f32 %v647, %v733
    %v776 = vmul.f32 %v648, %v735
    %v777 = vmul.f32 %v649, %v737
    %v778 = vmul.f32 %v650, %v739
    %v779 = vmul.f32 %v651, %v741
    %v780 = vmul.f32 %v652, %v743
    %v781 = vmul.f32 %v653, %v745
    %v782 = vmul.f32 %v654, %v747
    %v783 = vmul.f32 %v655, %v749
    %v784 = vmul.f32 %v656, %v751
    %v785 = vmul.f32 %v657, %v753
    %v786 = vand.u32 2147483647, %v76
    %v787 = vand.u32 2147483647, %v77
    %v788 = vand.u32 2147483647, %v78
    %v789 = vand.u32 2147483647, %v79
    %v790 = vand.u32 2147483647, %v80
    %v791 = vand.u32 2147483647, %v81
    %v792 = vand.u32 2147483647, %v82
    %v793 = vand.u32 2147483647, %v83
    %v794 = vand.u32 2147483647, %v84
    %v795 = vand.u32 2147483647, %v85
    %v796 = vand.u32 2147483647, %v86
    %v797 = vand.u32 2147483647, %v87
    %v798 = vand.u32 2147483647, %v88
    %v799 = vand.u32 2147483647, %v89
    %v800 = vand.u32 2147483647, %v90
    %v801 = vand.u32 2147483647, %v91
    %818 = vrot.lane.b32.xlu0 %v786, 2
    %v819 = vpop.permute.xlu0 %818
    %820 = vrot.lane.b32.xlu0 %v787, 2
    %v821 = vpop.permute.xlu0 %820
    %822 = vrot.lane.b32.xlu0 %v788, 2
    %v823 = vpop.permute.xlu0 %822
    %824 = vrot.lane.b32.xlu0 %v789, 2
    %v825 = vpop.permute.xlu0 %824
    %826 = vrot.lane.b32.xlu0 %v790, 2
    %v827 = vpop.permute.xlu0 %826
    %828 = vrot.lane.b32.xlu0 %v791, 2
    %v829 = vpop.permute.xlu0 %828
    %830 = vrot.lane.b32.xlu0 %v792, 2
    %v831 = vpop.permute.xlu0 %830
    %832 = vrot.lane.b32.xlu0 %v793, 2
    %v833 = vpop.permute.xlu0 %832
    %834 = vrot.lane.b32.xlu0 %v794, 2
    %v835 = vpop.permute.xlu0 %834
    %836 = vrot.lane.b32.xlu0 %v795, 2
    %v837 = vpop.permute.xlu0 %836
    %838 = vrot.lane.b32.xlu0 %v796, 2
    %v839 = vpop.permute.xlu0 %838
    %840 = vrot.lane.b32.xlu0 %v797, 2
    %v841 = vpop.permute.xlu0 %840
    %842 = vrot.lane.b32.xlu0 %v798, 2
    %v843 = vpop.permute.xlu0 %842
    %844 = vrot.lane.b32.xlu0 %v799, 2
    %v845 = vpop.permute.xlu0 %844
    %846 = vrot.lane.b32.xlu0 %v800, 2
    %v847 = vpop.permute.xlu0 %846
    %848 = vrot.lane.b32.xlu0 %v801, 2
    %v849 = vpop.permute.xlu0 %848
    %v866 = vmul.f32 %v770, %v819
    %v867 = vmul.f32 %v771, %v821
    %v868 = vmul.f32 %v772, %v823
    %v869 = vmul.f32 %v773, %v825
    %v870 = vmul.f32 %v774, %v827
    %v871 = vmul.f32 %v775, %v829
    %v872 = vmul.f32 %v776, %v831
    %v873 = vmul.f32 %v777, %v833
    %v874 = vmul.f32 %v778, %v835
    %v875 = vmul.f32 %v779, %v837
    %v876 = vmul.f32 %v780, %v839
    %v877 = vmul.f32 %v781, %v841
    %v878 = vmul.f32 %v782, %v843
    %v879 = vmul.f32 %v783, %v845
    %v880 = vmul.f32 %v784, %v847
    %v881 = vmul.f32 %v785, %v849
    %vm882 = vcmask 146448
    %v883 = vsel %vm882, %v866, 0.0
    %v884 = vsel %vm882, %v867, 0.0
    %v885 = vadd.f32 %v883, %v884
    %v886 = vsel %vm882, %v868, 0.0
    %v887 = vadd.f32 %v885, %v886
    %v888 = vsel %vm882, %v869, 0.0
    %v889 = vadd.f32 %v887, %v888
    %v890 = vsel %vm882, %v870, 0.0
    %v891 = vadd.f32 %v889, %v890
    %v892 = vsel %vm882, %v871, 0.0
    %v893 = vadd.f32 %v891, %v892
    %v894 = vsel %vm882, %v872, 0.0
    %v895 = vadd.f32 %v893, %v894
    %v896 = vsel %vm882, %v873, 0.0
    %v897 = vadd.f32 %v895, %v896
    %v898 = vsel %vm882, %v874, 0.0
    %v899 = vadd.f32 %v897, %v898
    %v900 = vsel %vm882, %v875, 0.0
    %v901 = vadd.f32 %v899, %v900
    %v902 = vsel %vm882, %v876, 0.0
    %v903 = vadd.f32 %v901, %v902
    %v904 = vsel %vm882, %v877, 0.0
    %v905 = vadd.f32 %v903, %v904
    %v906 = vsel %vm882, %v878, 0.0
    %v907 = vadd.f32 %v905, %v906
    %v908 = vsel %vm882, %v879, 0.0
    %v909 = vadd.f32 %v907, %v908
    %v910 = vsel %vm882, %v880, 0.0
    %v911 = vadd.f32 %v909, %v910
    %v912 = vsel %vm882, %v881, 0.0
    %v913 = vadd.f32 %v911, %v912
    %v914 = vrot.slane %v913, 4
    %v915 = vadd.f32 %v913, %v914
    %v916 = vrot.slane %v915, 2
    %v917 = vadd.f32 %v915, %v916
    %v918 = vrot.slane %v917, 1
    %v919 = vadd.f32 %v917, %v918
    %921 = vrot.lane.b32.xlu0 %v919, 126
    %v922 = vpop.permute.xlu0 %921
    %vm924 = vcmask 122880
    %925 = vst.msk [vmem:[#allocation8] sm:$0x1] %vm924, %v922
    // Predicated region
    $region18: #{tpu_custom_call.1} parent=1 // pred_check
      _
    $region19: #{tpu_custom_call.1} parent=1 // pred_check_branch
      %927 = sbr.rel (0) target = $region21
    $region20: #{tpu_custom_call.1} parent=1 // pred_region
      %929 = vsyncadd [#allocation5], 0
      %s931 = sshll.u32 [#allocation8], 4
      %s932 = int_to_ptr.vmem [resolvable:$true] %s931
      %s933 = sshll.u32 %s2, 4
      %s934 = int_to_ptr.hbm [resolvable:$true] %s933
      %936 = dma.vmem_to_hbm [thread:$0]  %s932, 16, %s934, [#allocation5]
    $region21: #{tpu_custom_call.1} parent=1 // pred_fallthru
      _
    // Predicated region
    $region22: #{tpu_custom_call.1} parent=1 // pred_check
      _
    $region23: #{tpu_custom_call.1} parent=1 // pred_check_branch
      %938 = sbr.rel (0) target = $region25
    $region24: #{tpu_custom_call.1} parent=1 // pred_region
      %940 = dma.done [#allocation5], 16
    $region25: #{tpu_custom_call.1} parent=1 // pred_fallthru
      _
    %941 = vsyncpa [#allocation4], 1
    %942 = vsyncpa [#allocation7], 1
    %943 = vsyncpa [#allocation5], 1

</llo_original>
